<compile_context>
chip_gen: v6e
topology: v6e:2x2x1
jax: 0.10.0
libtpu: 0.0.40
codegen_flags: <defaults>
</compile_context>

<pallas_src>
import functools

import jax
import jax.numpy as jnp
from jax.experimental import pallas as pl
from jax.experimental.pallas import tpu as pltpu


def _round_up(x, m):
    return ((x + m - 1) // m) * m


def header_kernel(x_ref, w1_ref, b1_ref, w2_ref, b2_ref, w3_ref, b3_ref, o_ref,
                  *, reduce_out):
    # In-kernel MXU cast (f32 -> bf16); x stays f32 in HBM, the VPU cast hides under DMA.
    x = x_ref[...].astype(w1_ref.dtype)
    # layer1 + ReLU (bf16 MXU inputs, f32 accumulation, f32 epilogue)
    h1 = jnp.dot(x, w1_ref[...], preferred_element_type=jnp.float32)
    h1 = jnp.maximum(h1 + b1_ref[...], 0.0)
    # layer2 + ReLU
    h2 = jnp.dot(h1.astype(w2_ref.dtype), w2_ref[...],
                 preferred_element_type=jnp.float32)
    h2 = jnp.maximum(h2 + b2_ref[...], 0.0)
    if reduce_out:
        # O == 1: VPU multiply + lane reduction (XLU slot is idle here -> ~free).
        # w3_ref is the torch row (1, H2P), kept f32 (v5e VPU has no bf16).
        h3 = jnp.sum(h2 * w3_ref[...], axis=-1, keepdims=True) + b3_ref[...]
    else:
        h3 = jnp.dot(h2.astype(w3_ref.dtype), w3_ref[...],
                     preferred_element_type=jnp.float32) + b3_ref[...]
    # Narrow (tile_b, O) store: HBM writeback is exactly the bytes the caller needs.
    o_ref[...] = h3.astype(o_ref.dtype)


def prepare_params(params, *, use_bf16=True):
    """One-time weight prep: torch (out, in) layout -> kernel layout, padded / cast."""
    mm_dtype = jnp.bfloat16 if use_bf16 else jnp.float32
    H1 = params["w1"].shape[0]            # 128
    H2 = params["w2"].shape[0]            # 64
    O = params["w3"].shape[0]
    H2P = _round_up(H2, 128)              # pad hidden2 to full 128-lane vregs (VMEM only)
    reduce_out = (O == 1)

    w1 = params["w1"].T.astype(mm_dtype)                                  # (D, 128)
    b1 = params["b1"][None, :].astype(jnp.float32)                        # (1, 128)
    w2 = jnp.zeros((H1, H2P), mm_dtype).at[:, :H2].set(
        params["w2"].T.astype(mm_dtype))                                  # (128, 128)
    b2 = jnp.zeros((1, H2P), jnp.float32).at[:, :H2].set(
        params["b2"].astype(jnp.float32))                                 # (1, 128)
    if reduce_out:
        w3 = jnp.zeros((1, H2P), jnp.float32).at[:, :H2].set(
            params["w3"].astype(jnp.float32))                             # (1, 128)
    else:
        w3 = jnp.zeros((H2P, O), mm_dtype).at[:H2, :].set(
            params["w3"].T.astype(mm_dtype))                              # (128, O)
    b3 = params["b3"][None, :].astype(jnp.float32)                        # (1, O)
    return {"w1": w1, "b1": b1, "w2": w2, "b2": b2, "w3": w3, "b3": b3,
            "reduce_out": reduce_out, "H1": H1, "H2P": H2P, "O": O}


def _choose_tile_b(batch, d, h_cols, o, cap_bytes):
    """Batch tile: start big (per-grid-step overhead ~0.35us dominates small tiles);
    shrink only for VMEM fit and to keep >=4 grid steps (2 per TC on v7x)."""
    tile = 4096
    budget = cap_bytes // 3               # leave room for compiler scratch + weights

    def footprint(t):
        return (2 * t * d * 4             # f32 x tile, double-buffered
                + t * d * 2               # in-kernel bf16 copy of x
                + 2 * t * o * 4           # out tile, double-buffered
                + t * h_cols * 4)         # f32 intermediates (h1 + h2)

    while tile > 256 and footprint(tile) > budget:
        tile //= 2
    while tile > 128 and pl.cdiv(batch, tile) < 4:
        tile //= 2
    tile = min(tile, _round_up(batch, 8))
    return max(8, tile)


def make_header_forward(params, *, use_bf16=True, tile_b=None, min_pallas_batch=64):
    """Hoists weight prep out of the per-call path and returns a jitted forward."""
    prepped = prepare_params(params, use_bf16=use_bf16)
    try:
        vmem_cap = int(pltpu.get_tpu_info().vmem_capacity_bytes)
    except Exception:
        vmem_cap = 64 << 20               # conservative default: v7x per-TC VMEM

    @jax.jit
    def fwd(scores):
        B, D = scores.shape
        H1, H2P, O = prepped["H1"], prepped["H2P"], prepped["O"]
        reduce_out = prepped["reduce_out"]

        # Tiny calls: a pallas_call is pure launch/DMA overhead here -> plain XLA.
        if B < min_pallas_batch:
            return header_ref(scores, params)

        tb = tile_b if tile_b is not None else _choose_tile_b(
            B, D, H1 + H2P, O, vmem_cap)
        grid = (pl.cdiv(B, tb),)          # ragged tail = clipped partial block (no pad)

        w1, b1 = prepped["w1"], prepped["b1"]
        w2, b2 = prepped["w2"], prepped["b2"]
        w3, b3 = prepped["w3"], prepped["b3"]

        # VMEM budget from the actual tile footprint, capped for v7x's 64 MiB/TC.
        w_bytes = sum(int(a.size) * a.dtype.itemsize
                      for a in (w1, b1, w2, b2, w3, b3))
        vmem_est = (2 * tb * D * 4                 # x tile (f32), double-buffered
                    + tb * D * 2                   # in-kernel bf16 copy of x
                    + 2 * tb * O * 4               # out tile, double-buffered
                    + 2 * w_bytes                  # constants (default double-buffered)
                    + tb * (H1 + H2P + O) * 4      # f32 intermediates
                    + (4 << 20))                   # headroom
        vmem_limit = int(min(max(vmem_est, 12 << 20),
                             min(48 << 20, (vmem_cap * 3) // 4)))

        full = lambda i: (0, 0)           # constants: one block, never re-indexed
        # TODO(synk): the six constant operands could take pipeline_mode=pl.Buffered(1)
        # to reclaim their second VMEM buffer (~100 KiB); skipped for portability.
        return pl.pallas_call(
            functools.partial(header_kernel, reduce_out=reduce_out),
            out_shape=jax.ShapeDtypeStruct((B, O), scores.dtype),
            grid_spec=pltpu.PrefetchScalarGridSpec(
                num_scalar_prefetch=0,
                grid=grid,
                in_specs=[
                    pl.BlockSpec((tb, D), lambda i: (i, 0)),   # x tile (f32 in HBM)
                    pl.BlockSpec(w1.shape, full),
                    pl.BlockSpec(b1.shape, full),
                    pl.BlockSpec(w2.shape, full),
                    pl.BlockSpec(b2.shape, full),
                    pl.BlockSpec(w3.shape, full),
                    pl.BlockSpec(b3.shape, full),
                ],
                out_specs=pl.BlockSpec((tb, O), lambda i: (i, 0)),
            ),
            compiler_params=pltpu.CompilerParams(
                dimension_semantics=("parallel",),
                vmem_limit_bytes=vmem_limit,
            ),
        )(scores, w1, b1, w2, b2, w3, b3)

    return fwd


def init_params(key, input_dim, output_dim):
    """Deterministic synthetic parameters, PyTorch nn.Linear layout (out, in)."""
    ks = jax.random.split(key, 6)
    scale = 0.1
    return {
        "w1": scale * jax.random.normal(ks[0], (128, input_dim), jnp.float32),
        "b1": scale * jax.random.normal(ks[1], (128,), jnp.float32),
        "w2": scale * jax.random.normal(ks[2], (64, 128), jnp.float32),
        "b2": scale * jax.random.normal(ks[3], (64,), jnp.float32),
        "w3": scale * jax.random.normal(ks[4], (output_dim, 64), jnp.float32),
        "b3": scale * jax.random.normal(ks[5], (output_dim,), jnp.float32),
    }


def header_ref(scores, params):
    x = scores @ params["w1"].T + params["b1"]
    x = jnp.maximum(x, 0.0)
    x = x @ params["w2"].T + params["b2"]
    x = jnp.maximum(x, 0.0)
    x = x @ params["w3"].T + params["b3"]
    return x


if __name__ == "__main__":
    key = jax.random.PRNGKey(0)
    k_in, k_in2, k_p = jax.random.split(key, 3)

    input_dim, output_dim = 32, 1
    params = init_params(k_p, input_dim, output_dim)

    # Pallas path: ragged batch (tile_b=128 -> 2 grid steps, partial trailing block).
    fwd = make_header_forward(params)
    B = 200
    scores = jax.random.normal(k_in, (B, input_dim), jnp.float32)
    out = jax.block_until_ready(fwd(scores))
    ref = header_ref(scores, params)
    assert out.shape == (B, output_dim)
    assert bool(jnp.all(jnp.isfinite(out)))
    # bf16 MXU inputs with f32 accumulation -> compare to f32 ref with loose tol.
    assert jnp.allclose(out, ref, atol=2e-2, rtol=2e-2), float(
        jnp.max(jnp.abs(out - ref)))

    # Exact-path check (f32 end-to-end through the same kernel).
    fwd_f32 = make_header_forward(params, use_bf16=False)
    out_f32 = jax.block_until_ready(fwd_f32(scores))
    assert jnp.allclose(out_f32, ref, atol=1e-4, rtol=1e-4)

    # Tiny batch: XLA fallback keeps original module semantics without kernel overhead.
    scores_s = jax.random.normal(k_in2, (8, input_dim), jnp.float32)
    out_s = jax.block_until_ready(fwd(scores_s))
    assert out_s.shape == (8, output_dim)
    assert jnp.allclose(out_s, header_ref(scores_s, params), atol=1e-5, rtol=1e-5)

    print("KERNEL_OK")
</pallas_src>

<mosaic_0001>
module attributes {stable_mosaic.version = 11 : i64} {
  func.func @header_kernel(%arg0: i32, %arg1: memref<128x32xf32, #tpu.memory_space<vmem>>, %arg2: memref<32x128xbf16, #tpu.memory_space<vmem>>, %arg3: memref<1x128xf32, #tpu.memory_space<vmem>>, %arg4: memref<128x128xbf16, #tpu.memory_space<vmem>>, %arg5: memref<1x128xf32, #tpu.memory_space<vmem>>, %arg6: memref<1x128xf32, #tpu.memory_space<vmem>>, %arg7: memref<1x1xf32, #tpu.memory_space<vmem>>, %arg8: memref<128x1xf32, #tpu.memory_space<vmem>>) attributes {dimension_semantics = [#tpu.dimension_semantics<parallel>], iteration_bounds = array<i64: 2>, scalar_prefetch = 0 : i64, scratch_operands = 0 : i64, tpu.core_type = #tpu.core_type<tc>, window_params = [{transform_indices = @transform_0, window_bounds = array<i64: 128, 32>}, {pipeline_mode = #tpu.pipeline_mode<synchronous>, transform_indices = @transform_1, window_bounds = array<i64: 32, 128>}, {pipeline_mode = #tpu.pipeline_mode<synchronous>, transform_indices = @transform_2, window_bounds = array<i64: 1, 128>}, {pipeline_mode = #tpu.pipeline_mode<synchronous>, transform_indices = @transform_3, window_bounds = array<i64: 128, 128>}, {pipeline_mode = #tpu.pipeline_mode<synchronous>, transform_indices = @transform_4, window_bounds = array<i64: 1, 128>}, {pipeline_mode = #tpu.pipeline_mode<synchronous>, transform_indices = @transform_5, window_bounds = array<i64: 1, 128>}, {pipeline_mode = #tpu.pipeline_mode<synchronous>, transform_indices = @transform_6, window_bounds = array<i64: 1, 1>}, {transform_indices = @transform_7, window_bounds = array<i64: 128, 1>}]} {
    %c0 = arith.constant 0 : index
    %c0_0 = arith.constant 0 : index
    %0 = vector.load %arg1[%c0, %c0_0] : memref<128x32xf32, #tpu.memory_space<vmem>>, vector<128x32xf32>
    %1 = arith.truncf %0 : vector<128x32xf32> to vector<128x32xbf16>
    %c0_1 = arith.constant 0 : index
    %c0_2 = arith.constant 0 : index
    %2 = vector.load %arg2[%c0_1, %c0_2] : memref<32x128xbf16, #tpu.memory_space<vmem>>, vector<32x128xbf16>
    %cst = arith.constant dense<0.000000e+00> : vector<128x128xf32>
    %3 = tpu.matmul %1, %2, %cst {dimension_numbers = #tpu.dot_dimension_numbers<[1], [0], [0], [1], [0, 0, 1, 1], [], []>} : vector<128x32xbf16>, vector<32x128xbf16>, vector<128x128xf32> -> vector<128x128xf32>
    %c0_3 = arith.constant 0 : index
    %c0_4 = arith.constant 0 : index
    %4 = vector.load %arg3[%c0_3, %c0_4] : memref<1x128xf32, #tpu.memory_space<vmem>>, vector<1x128xf32>
    %5 = vector.broadcast %4 : vector<1x128xf32> to vector<128x128xf32>
    %6 = arith.addf %3, %5 : vector<128x128xf32>
    %cst_5 = arith.constant 0.000000e+00 : f32
    %7 = vector.broadcast %cst_5 : f32 to vector<128x128xf32>
    %8 = arith.maximumf %6, %7 : vector<128x128xf32>
    %9 = arith.truncf %8 : vector<128x128xf32> to vector<128x128xbf16>
    %c0_6 = arith.constant 0 : index
    %c0_7 = arith.constant 0 : index
    %10 = vector.load %arg4[%c0_6, %c0_7] : memref<128x128xbf16, #tpu.memory_space<vmem>>, vector<128x128xbf16>
    %cst_8 = arith.constant dense<0.000000e+00> : vector<128x128xf32>
    %11 = tpu.matmul %9, %10, %cst_8 {dimension_numbers = #tpu.dot_dimension_numbers<[1], [0], [0], [1], [0, 0, 1, 1], [], []>} : vector<128x128xbf16>, vector<128x128xbf16>, vector<128x128xf32> -> vector<128x128xf32>
    %c0_9 = arith.constant 0 : index
    %c0_10 = arith.constant 0 : index
    %12 = vector.load %arg5[%c0_9, %c0_10] : memref<1x128xf32, #tpu.memory_space<vmem>>, vector<1x128xf32>
    %13 = vector.broadcast %12 : vector<1x128xf32> to vector<128x128xf32>
    %14 = arith.addf %11, %13 : vector<128x128xf32>
    %cst_11 = arith.constant 0.000000e+00 : f32
    %15 = vector.broadcast %cst_11 : f32 to vector<128x128xf32>
    %16 = arith.maximumf %14, %15 : vector<128x128xf32>
    %c0_12 = arith.constant 0 : index
    %c0_13 = arith.constant 0 : index
    %17 = vector.load %arg6[%c0_12, %c0_13] : memref<1x128xf32, #tpu.memory_space<vmem>>, vector<1x128xf32>
    %18 = vector.broadcast %17 : vector<1x128xf32> to vector<128x128xf32>
    %19 = arith.mulf %16, %18 : vector<128x128xf32>
    %cst_14 = arith.constant dense<0.000000e+00> : vector<128xf32>
    %20 = vector.multi_reduction <add>, %19, %cst_14 [1] : vector<128x128xf32> to vector<128xf32>
    %21 = vector.shape_cast %20 : vector<128xf32> to vector<128x1xf32>
    %c0_15 = arith.constant 0 : index
    %c0_16 = arith.constant 0 : index
    %22 = vector.load %arg7[%c0_15, %c0_16] : memref<1x1xf32, #tpu.memory_space<vmem>>, vector<1x1xf32>
    %23 = vector.broadcast %22 : vector<1x1xf32> to vector<128x1xf32>
    %24 = arith.addf %21, %23 : vector<128x1xf32>
    %c0_17 = arith.constant 0 : index
    %c0_18 = arith.constant 0 : index
    %25 = vector.load %arg8[%c0_17, %c0_18] : memref<128x1xf32, #tpu.memory_space<vmem>>, vector<128x1xf32>
    tpu.vector_store %arg8[%c0_17, %c0_18], %24 {strides = array<i32>} : memref<128x1xf32, #tpu.memory_space<vmem>>, vector<128x1xf32>,
    return
  }
  func.func @transform_0(%arg0: i32) -> (i32, i32) {
    %c0_i32 = arith.constant 0 : i32
    %c0_i32_0 = arith.constant 0 : i32
    return %arg0, %c0_i32 : i32, i32
  }
  func.func @transform_1(%arg0: i32) -> (i32, i32) {
    %c0_i32 = arith.constant 0 : i32
    %c0_i32_0 = arith.constant 0 : i32
    %c0_i32_1 = arith.constant 0 : i32
    return %c0_i32, %c0_i32_0 : i32, i32
  }
  func.func @transform_2(%arg0: i32) -> (i32, i32) {
    %c0_i32 = arith.constant 0 : i32
    %c0_i32_0 = arith.constant 0 : i32
    %c0_i32_1 = arith.constant 0 : i32
    return %c0_i32, %c0_i32_0 : i32, i32
  }
  func.func @transform_3(%arg0: i32) -> (i32, i32) {
    %c0_i32 = arith.constant 0 : i32
    %c0_i32_0 = arith.constant 0 : i32
    %c0_i32_1 = arith.constant 0 : i32
    return %c0_i32, %c0_i32_0 : i32, i32
  }
  func.func @transform_4(%arg0: i32) -> (i32, i32) {
    %c0_i32 = arith.constant 0 : i32
    %c0_i32_0 = arith.constant 0 : i32
    %c0_i32_1 = arith.constant 0 : i32
    return %c0_i32, %c0_i32_0 : i32, i32
  }
  func.func @transform_5(%arg0: i32) -> (i32, i32) {
    %c0_i32 = arith.constant 0 : i32
    %c0_i32_0 = arith.constant 0 : i32
    %c0_i32_1 = arith.constant 0 : i32
    return %c0_i32, %c0_i32_0 : i32, i32
  }
  func.func @transform_6(%arg0: i32) -> (i32, i32) {
    %c0_i32 = arith.constant 0 : i32
    %c0_i32_0 = arith.constant 0 : i32
    %c0_i32_1 = arith.constant 0 : i32
    return %c0_i32, %c0_i32_0 : i32, i32
  }
  func.func @transform_7(%arg0: i32) -> (i32, i32) {
    %c0_i32 = arith.constant 0 : i32
    %c0_i32_0 = arith.constant 0 : i32
    return %arg0, %c0_i32 : i32, i32
  }
}

</mosaic_0001>

<llo_original>
// kernel: fwd.1
$region0: #{fwd.1}
  #allocation0 [shape = 'u32[]', space=smem, size = 0x4, offset = 0x4, fixed_abs, tag = 'smem constant byte address 0x4 - core index']
  #allocation1 [shape = 'u32[144,128]{1,0:T(1,128)}', space=vmem, size = 0x12000, scoped, tag = 'internal scratch']
  #allocation2 [shape = 'f32[1,1]{1,0:T(1,128)S(1)}', space=vmem, size = 0x200, scoped, tag = 'scoped memory for fwd.1']
  %s0 = inlined_call_operand.vmem [shape: f32[200,32], index: 0, kind: input, shape index: {}]
  %s1 = inlined_call_operand.vmem [shape: bf16[32,128], index: 1, kind: input, shape index: {}]
  %s2 = inlined_call_operand.vmem [shape: f32[1,128], index: 2, kind: input, shape index: {}]
  %s3 = inlined_call_operand.vmem [shape: bf16[128,128], index: 3, kind: input, shape index: {}]
  %s4 = inlined_call_operand.vmem [shape: f32[1,128], index: 4, kind: input, shape index: {}]
  %s5 = inlined_call_operand.vmem [shape: f32[1,128], index: 5, kind: input, shape index: {}]
  %s6 = inlined_call_operand.<no memory space> [shape: f32[1,1], index: 6, kind: input, shape index: {}]
  %s7 = inlined_call_operand.vmem [shape: f32[200,1], index: 7, kind: output, shape index: {}]
  %s8 = sld [smem:[#allocation0]]
  $region109: #{fwd.1} parent=0
    _
  %s10 = ssub.s32 1, %s8
  %s11 = scalar_select 0, %s10, %s8
  %v12 = vstv %s6
  %13 = vst [vmem:[#allocation2] sm:$0x1] %v12
  $region1: #{fwd.1} parent=0
    #allocation3 [shape = 'u8[131072]{0}', space=vmem, size = 0x20000, scoped, tag = 'output window, operand 0']
    loop: start=0, step=1, limit=4
    $region2: #{fwd.1} parent=1 // loop_pre_header
      _
    $region3: #{fwd.1} parent=1 // loop_header
      %s15 = sphi 0, %s19
      %p16 = scmp.ge.s32.totalorder %s15, 4
      %s25 = sphi 0, %s27
      %s28 = sphi 0, %s25
      %s29 = sphi 0, %s28
      %s45 = sphi 0, %s29
      %s49 = sphi 0, %s49
      %s51 = sphi 0, %s49
      %s52 = sphi 0, %s51
      %s66 = sphi 0, %s52
      %s70 = sphi 0, %s70
      %s72 = sphi 0, %s70
      %s73 = sphi 0, %s72
      %s87 = sphi 0, %s73
      %s91 = sphi 0, %s91
      %s93 = sphi 0, %s91
      %s94 = sphi 0, %s93
      %s108 = sphi 0, %s94
      %s112 = sphi 0, %s112
      %s114 = sphi 0, %s112
      %s115 = sphi 0, %s114
      %s129 = sphi 0, %s115
      %s133 = sphi 0, %s133
      %s135 = sphi 0, %s133
      %s136 = sphi 0, %s135
      %s150 = sphi 0, %s136
      %s154 = sphi 0, %s154
      %s156 = sphi 0, %s154
      %s157 = sphi 0, %s156
      %s171 = sphi 0, %s157
      %s177 = sphi 0, %s179
      %s180 = sphi 0, %s177
      %s181 = sphi 0, %s180
      %s197 = sphi 0, %s181
    $region4: #{fwd.1} parent=1 // loop_header_branch
      %18 = sbr.rel (%p16) target = $region8
    $region5: #{fwd.1} parent=1 // loop_body
      %s20 = ssub.s32 %s15, 1
      %s21 = ssub.s32 %s15, 2
      %s22 = sadd.s32 %s15, 1
      %s23 = ssub.s32 %s15, %s22
      %p24 = scmp.eq.s32.totalorder %s23, 0
      %s26 = sadd.s32 %s25, 1
      %s27 = scalar_select %p24, %s25, %s26
      %p30 = pneg %p24
      %p31 = scmp.eq.s32.totalorder %s15, 1
      %p32 = por %p30, %p31
      %p33 = scmp.ne.s32.totalorder %s25, %s28
      %p34 = scmp.eq.s32.totalorder %s15, 0
      %p35 = por %p33, %p34
      %p36 = scmp.ne.s32.totalorder %s25, %s28
      %p37 = scmp.eq.s32.totalorder %s20, 1
      %p38 = por %p36, %p37
      %p39 = scmp.ne.s32.totalorder %s28, %s29
      %p40 = scmp.eq.s32.totalorder %s20, 0
      %p41 = por %p39, %p40
      %p42 = scmp.ne.s32.totalorder %s28, %s29
      %p43 = scmp.eq.s32.totalorder %s21, 1
      %p44 = por %p42, %p43
      %p46 = scmp.ne.s32.totalorder %s29, %s45
      %p47 = scmp.eq.s32.totalorder %s21, 0
      %p48 = por %p46, %p47
      %s50 = sadd.s32 %s49, 1
      %p53 = scmp.eq.s32.totalorder %s15, 1
      %p54 = scmp.ne.s32.totalorder %s49, %s51
      %p55 = scmp.eq.s32.totalorder %s15, 0
      %p56 = por %p54, %p55
      %p57 = scmp.ne.s32.totalorder %s49, %s51
      %p58 = scmp.eq.s32.totalorder %s20, 1
      %p59 = por %p57, %p58
      %p60 = scmp.ne.s32.totalorder %s51, %s52
      %p61 = scmp.eq.s32.totalorder %s20, 0
      %p62 = por %p60, %p61
      %p63 = scmp.ne.s32.totalorder %s51, %s52
      %p64 = scmp.eq.s32.totalorder %s21, 1
      %p65 = por %p63, %p64
      %p67 = scmp.ne.s32.totalorder %s52, %s66
      %p68 = scmp.eq.s32.totalorder %s21, 0
      %p69 = por %p67, %p68
      %s71 = sadd.s32 %s70, 1
      %p74 = scmp.eq.s32.totalorder %s15, 1
      %p75 = scmp.ne.s32.totalorder %s70, %s72
      %p76 = scmp.eq.s32.totalorder %s15, 0
      %p77 = por %p75, %p76
      %p78 = scmp.ne.s32.totalorder %s70, %s72
      %p79 = scmp.eq.s32.totalorder %s20, 1
      %p80 = por %p78, %p79
      %p81 = scmp.ne.s32.totalorder %s72, %s73
      %p82 = scmp.eq.s32.totalorder %s20, 0
      %p83 = por %p81, %p82
      %p84 = scmp.ne.s32.totalorder %s72, %s73
      %p85 = scmp.eq.s32.totalorder %s21, 1
      %p86 = por %p84, %p85
      %p88 = scmp.ne.s32.totalorder %s73, %s87
      %p89 = scmp.eq.s32.totalorder %s21, 0
      %p90 = por %p88, %p89
      %s92 = sadd.s32 %s91, 1
      %p95 = scmp.eq.s32.totalorder %s15, 1
      %p96 = scmp.ne.s32.totalorder %s91, %s93
      %p97 = scmp.eq.s32.totalorder %s15, 0
      %p98 = por %p96, %p97
      %p99 = scmp.ne.s32.totalorder %s91, %s93
      %p100 = scmp.eq.s32.totalorder %s20, 1
      %p101 = por %p99, %p100
      %p102 = scmp.ne.s32.totalorder %s93, %s94
      %p103 = scmp.eq.s32.totalorder %s20, 0
      %p104 = por %p102, %p103
      %p105 = scmp.ne.s32.totalorder %s93, %s94
      %p106 = scmp.eq.s32.totalorder %s21, 1
      %p107 = por %p105, %p106
      %p109 = scmp.ne.s32.totalorder %s94, %s108
      %p110 = scmp.eq.s32.totalorder %s21, 0
      %p111 = por %p109, %p110
      %s113 = sadd.s32 %s112, 1
      %p116 = scmp.eq.s32.totalorder %s15, 1
      %p117 = scmp.ne.s32.totalorder %s112, %s114
      %p118 = scmp.eq.s32.totalorder %s15, 0
      %p119 = por %p117, %p118
      %p120 = scmp.ne.s32.totalorder %s112, %s114
      %p121 = scmp.eq.s32.totalorder %s20, 1
      %p122 = por %p120, %p121
      %p123 = scmp.ne.s32.totalorder %s114, %s115
      %p124 = scmp.eq.s32.totalorder %s20, 0
      %p125 = por %p123, %p124
      %p126 = scmp.ne.s32.totalorder %s114, %s115
      %p127 = scmp.eq.s32.totalorder %s21, 1
      %p128 = por %p126, %p127
      %p130 = scmp.ne.s32.totalorder %s115, %s129
      %p131 = scmp.eq.s32.totalorder %s21, 0
      %p132 = por %p130, %p131
      %s134 = sadd.s32 %s133, 1
      %p137 = scmp.eq.s32.totalorder %s15, 1
      %p138 = scmp.ne.s32.totalorder %s133, %s135
      %p139 = scmp.eq.s32.totalorder %s15, 0
      %p140 = por %p138, %p139
      %p141 = scmp.ne.s32.totalorder %s133, %s135
      %p142 = scmp.eq.s32.totalorder %s20, 1
      %p143 = por %p141, %p142
      %p144 = scmp.ne.s32.totalorder %s135, %s136
      %p145 = scmp.eq.s32.totalorder %s20, 0
      %p146 = por %p144, %p145
      %p147 = scmp.ne.s32.totalorder %s135, %s136
      %p148 = scmp.eq.s32.totalorder %s21, 1
      %p149 = por %p147, %p148
      %p151 = scmp.ne.s32.totalorder %s136, %s150
      %p152 = scmp.eq.s32.totalorder %s21, 0
      %p153 = por %p151, %p152
      %s155 = sadd.s32 %s154, 1
      %p158 = scmp.eq.s32.totalorder %s15, 1
      %p159 = scmp.ne.s32.totalorder %s154, %s156
      %p160 = scmp.eq.s32.totalorder %s15, 0
      %p161 = por %p159, %p160
      %p162 = scmp.ne.s32.totalorder %s154, %s156
      %p163 = scmp.eq.s32.totalorder %s20, 1
      %p164 = por %p162, %p163
      %p165 = scmp.ne.s32.totalorder %s156, %s157
      %p166 = scmp.eq.s32.totalorder %s20, 0
      %p167 = por %p165, %p166
      %p168 = scmp.ne.s32.totalorder %s156, %s157
      %p169 = scmp.eq.s32.totalorder %s21, 1
      %p170 = por %p168, %p169
      %p172 = scmp.ne.s32.totalorder %s157, %s171
      %p173 = scmp.eq.s32.totalorder %s21, 0
      %p174 = por %p172, %p173
      %s175 = ssub.s32 %s15, %s22
      %p176 = scmp.eq.s32.totalorder %s175, 0
      %s178 = sadd.s32 %s177, 1
      %s179 = scalar_select %p176, %s177, %s178
      %p182 = pneg %p176
      %p183 = scmp.eq.s32.totalorder %s15, 1
      %p184 = por %p182, %p183
      %p185 = scmp.ne.s32.totalorder %s177, %s180
      %p186 = scmp.eq.s32.totalorder %s15, 0
      %p187 = por %p185, %p186
      %p188 = scmp.ne.s32.totalorder %s177, %s180
      %p189 = scmp.eq.s32.totalorder %s20, 1
      %p190 = por %p188, %p189
      %p191 = scmp.ne.s32.totalorder %s180, %s181
      %p192 = scmp.eq.s32.totalorder %s20, 0
      %p193 = por %p191, %p192
      %p194 = scmp.ne.s32.totalorder %s180, %s181
      %p195 = scmp.eq.s32.totalorder %s21, 1
      %p196 = por %p194, %p195
      %p198 = scmp.ne.s32.totalorder %s181, %s197
      %p199 = scmp.eq.s32.totalorder %s21, 0
      %p200 = por %p198, %p199
      %p201 = scmp.le.s32.totalorder 1, %s15
      %p202 = scmp.lt.s32.totalorder %s15, 3
      %p203 = pnand %p201, %p202
      %p204 = pneg %p203
      // Predicated region
      $region9: #{fwd.1} parent=5 // pred_check
        _
      $region10: #{fwd.1} parent=5 // pred_check_branch
        %206 = sbr.rel (%p203) target = $region12
      $region11: #{fwd.1} parent=5 // pred_region
        %s207 = ssub.s32 %s15, 1
        // Predicated region
        $region13: #{fwd.1} parent=11 // pred_check
          %p208 = pneg %p62
        $region14: #{fwd.1} parent=11 // pred_check_branch
          %210 = sbr.rel (%p208) target = $region16
        $region15: #{fwd.1} parent=11 // pred_region
          _
        $region16: #{fwd.1} parent=11 // pred_fallthru
          _
        // Predicated region
        $region17: #{fwd.1} parent=11 // pred_check
          %p211 = pneg %p83
        $region18: #{fwd.1} parent=11 // pred_check_branch
          %213 = sbr.rel (%p211) target = $region20
        $region19: #{fwd.1} parent=11 // pred_region
          _
        $region20: #{fwd.1} parent=11 // pred_fallthru
          _
        // Predicated region
        $region21: #{fwd.1} parent=11 // pred_check
          %p214 = pneg %p104
        $region22: #{fwd.1} parent=11 // pred_check_branch
          %216 = sbr.rel (%p214) target = $region24
        $region23: #{fwd.1} parent=11 // pred_region
          _
        $region24: #{fwd.1} parent=11 // pred_fallthru
          _
        // Predicated region
        $region25: #{fwd.1} parent=11 // pred_check
          %p217 = pneg %p125
        $region26: #{fwd.1} parent=11 // pred_check_branch
          %219 = sbr.rel (%p217) target = $region28
        $region27: #{fwd.1} parent=11 // pred_region
          _
        $region28: #{fwd.1} parent=11 // pred_fallthru
          _
        // Predicated region
        $region29: #{fwd.1} parent=11 // pred_check
          %p220 = pneg %p146
        $region30: #{fwd.1} parent=11 // pred_check_branch
          %222 = sbr.rel (%p220) target = $region32
        $region31: #{fwd.1} parent=11 // pred_region
          _
        $region32: #{fwd.1} parent=11 // pred_fallthru
          _
        // Predicated region
        $region33: #{fwd.1} parent=11 // pred_check
          %p223 = pneg %p167
        $region34: #{fwd.1} parent=11 // pred_check_branch
          %225 = sbr.rel (%p223) target = $region36
        $region35: #{fwd.1} parent=11 // pred_region
          _
        $region36: #{fwd.1} parent=11 // pred_fallthru
          _
      $region12: #{fwd.1} parent=5 // pred_fallthru
        _
      %p226 = scmp.lt.s32.totalorder %s15, 2
      // Predicated region
      $region37: #{fwd.1} parent=5 // pred_check
        %p227 = pneg %p226
      $region38: #{fwd.1} parent=5 // pred_check_branch
        %229 = sbr.rel (%p227) target = $region40
      $region39: #{fwd.1} parent=5 // pred_region
        // Predicated region
        $region41: #{fwd.1} parent=39 // pred_check
          %p230 = pneg %p35
        $region42: #{fwd.1} parent=39 // pred_check_branch
          %232 = sbr.rel (%p230) target = $region44
        $region43: #{fwd.1} parent=39 // pred_region
          %s233 = smul.u32 16, %s15
          %s234 = ssub.s32 25, %s233
          %p235 = scmp.lt.s32.totalorder %s234, 16
          %s236 = scalar_select %p235, %s234, 16
          %s237 = smul.u32 128, %s236
          %p238 = scmp.lt.s32.totalorder %s233, 24
          %s239 = scalar_select %p238, %s233, 24
          %s240 = smul.addr %s239, 8
          %s241 = scalar_lea.vmem %s0, %s240
          %s242 = smul.u32 16, %s15
          %s243 = ssub.s32 25, %s242
          %p244 = scmp.lt.s32.totalorder %s243, 16
          %s245 = scalar_select %p244, %s243, 16
          %s246 = smul.u32 128, %s245
        $region44: #{fwd.1} parent=39 // pred_fallthru
          _
      $region40: #{fwd.1} parent=5 // pred_fallthru
        _
      %p247 = scmp.le.s32.totalorder 1, %s15
      %p248 = scmp.lt.s32.totalorder %s15, 3
      %p249 = pnand %p247, %p248
      %p250 = pneg %p249
      // Predicated region
      $region45: #{fwd.1} parent=5 // pred_check
        _
      $region46: #{fwd.1} parent=5 // pred_check_branch
        %252 = sbr.rel (%p249) target = $region48
      $region47: #{fwd.1} parent=5 // pred_region
        %s253 = ssub.s32 %s15, 1
        %s254 = smul.u32 16, %s20
        %s255 = ssub.s32 25, %s254
        %p256 = scmp.lt.s32.totalorder %s255, 16
        %s257 = scalar_select %p256, %s255, 16
        %s258 = smul.u32 128, %s257
        %p259 = scmp.lt.s32.totalorder %s254, 24
        %s260 = scalar_select %p259, %s254, 24
        %s261 = smul.addr %s260, 8
        %s262 = scalar_lea.vmem %s0, %s261
        %p263 = pneg %p41
        %p264 = pneg %p38
        %p265 = pneg %p62
        %p266 = pneg %p59
        %p267 = pneg %p83
        %p268 = pneg %p80
        %p269 = pneg %p104
        %p270 = pneg %p101
        %p271 = pneg %p125
        %p272 = pneg %p122
        %p273 = pneg %p146
        %p274 = pneg %p143
        %p275 = pneg %p167
        %p276 = pneg %p164
        %p277 = pneg %p193
        %p278 = pneg %p190
        %s279 = sand.u32 %s180, 1
        %s280 = sand.u32 %s180, 1
        %s281 = smul.addr %s280, 128
        %s282 = scalar_lea.vmem [#allocation3], %s281
        %s283 = smul.u32 16, %s20
        %s284 = ssub.s32 25, %s283
        %p285 = scmp.lt.s32.totalorder %s284, 16
        %s286 = scalar_select %p285, %s284, 16
        %s287 = smul.u32 128, %s286
        %p288 = scmp.lt.s32.totalorder %s283, 24
        %s289 = scalar_select %p288, %s283, 24
        %s290 = smul.addr %s289, 8
        %s291 = scalar_lea.vmem %s0, %s290
        %s292 = smul.u32 16, %s20
        %s293 = ssub.s32 25, %s292
        %p294 = scmp.lt.s32.totalorder %s293, 16
        %s295 = scalar_select %p294, %s293, 16
        %s296 = smul.u32 128, %s295
        %s297 = smul.u32 16, %s20
        %s298 = ssub.s32 25, %s297
        %p299 = scmp.lt.s32.totalorder %s298, 16
        %s300 = scalar_select %p299, %s298, 16
        %s301 = smul.u32 128, %s300
        %v303 = vld [vmem:[%s291] sm:$0xff]
        %v304 = vld [vmem:[%s291 + $0x8] sm:$0xff]
        %v305 = vld [vmem:[%s291 + $0x10] sm:$0xff]
        %v306 = vld [vmem:[%s291 + $0x18] sm:$0xff]
        %v307 = vld [vmem:[%s291 + $0x20] sm:$0xff]
        %v308 = vld [vmem:[%s291 + $0x28] sm:$0xff]
        %v309 = vld [vmem:[%s291 + $0x30] sm:$0xff]
        %v310 = vld [vmem:[%s291 + $0x38] sm:$0xff]
        %v311 = vld [vmem:[%s291 + $0x40] sm:$0xff]
        %v312 = vld [vmem:[%s291 + $0x48] sm:$0xff]
        %v313 = vld [vmem:[%s291 + $0x50] sm:$0xff]
        %v314 = vld [vmem:[%s291 + $0x58] sm:$0xff]
        %v315 = vld [vmem:[%s291 + $0x60] sm:$0xff]
        %v316 = vld [vmem:[%s291 + $0x68] sm:$0xff]
        %v317 = vld [vmem:[%s291 + $0x70] sm:$0xff]
        %v318 = vld [vmem:[%s291 + $0x78] sm:$0xff]
        %v319 = vpack.c.bf16 %v304, %v303
        %v320 = vpack.c.bf16 %v306, %v305
        %v321 = vpack.c.bf16 %v308, %v307
        %v322 = vpack.c.bf16 %v310, %v309
        %v323 = vpack.c.bf16 %v312, %v311
        %v324 = vpack.c.bf16 %v314, %v313
        %v325 = vpack.c.bf16 %v316, %v315
        %v326 = vpack.c.bf16 %v318, %v317
        %v327 = vld [vmem:[%s1] sm:$0xf]
        %v328 = vld [vmem:[%s1 + $0x4] sm:$0xf]
        %v329 = vld [vmem:[%s1 + $0x8] sm:$0xf]
        %v330 = vld [vmem:[%s1 + $0xc] sm:$0xf]
        %v331 = vld [vmem:[%s2] sm:$0x1]
        %v333 = vlaneseq
        %v334 = vshrl.u32 %v333, 7
        %v335 = vsub.s32 0, %v334
        %v336 = vrot.slane %v331, %v335
        %v342 = vunpack.c.l.b16 %v327
        %v343 = vunpack.c.l.b16 %v328
        %v344 = vunpack.c.l.b16 %v329
        %v345 = vunpack.c.l.b16 %v330
        %v346 = vpack.c.b16 %v343, %v342
        %v347 = vpack.c.b16 %v345, %v344
        %vm350 = vcmask 261120
        %v352 = vsel %vm350, %v319, 0
        %v355 = vsel %vm350, %v320, 0
        %v358 = vsel %vm350, %v321, 0
        %v361 = vsel %vm350, %v322, 0
        %v364 = vsel %vm350, %v323, 0
        %v367 = vsel %vm350, %v324, 0
        %v370 = vsel %vm350, %v325, 0
        %v373 = vsel %vm350, %v326, 0
        %375 = vmatprep.subr.bf16.mxu0 0
        %376 = vmatpush1.bf16.msra.mxu0 0
        %377 = vmatprep.subr.bf16.mxu0 0
        %378 = vmatpush1.bf16.msra.mxu0 0
        %379 = vmatprep.subr.bf16.mxu0 0
        %380 = vmatpush1.bf16.msra.mxu0 0
        %381 = vmatprep.subr.bf16.mxu0 0
        %382 = vmatpush1.bf16.msra.mxu0 0
        %383 = vmatprep.subr.bf16.mxu0 0
        %384 = vmatpush1.bf16.msra.mxu0 0
        %385 = vmatprep.subr.bf16.mxu0 0
        %386 = vmatpush1.bf16.msra.mxu0 0
        %387 = vmatprep.subr.bf16.mxu0 0
        %388 = vmatpush1.bf16.msra.mxu0 %v347
        %389 = vmatprep.subr.bf16.mxu0 0
        %390 = vmatpush1.bf16.msra.mxu0 %v346
        %391 = vmatprep.subr.bf16.mxu0 0
        %392 = vmatpush2.bf16.msra.mxu0 0
        %393 = vmatprep.subr.bf16.mxu0 0
        %394 = vmatpush2.bf16.msra.mxu0 0
        %395 = vmatprep.subr.bf16.mxu0 0
        %396 = vmatpush2.bf16.msra.mxu0 0
        %397 = vmatprep.subr.bf16.mxu0 0
        %398 = vmatpush2.bf16.msra.mxu0 0
        %399 = vmatprep.subr.bf16.mxu0 0
        %400 = vmatpush2.bf16.msra.mxu0 0
        %401 = vmatprep.subr.bf16.mxu0 0
        %402 = vmatpush2.bf16.msra.mxu0 0
        %403 = vmatprep.subr.bf16.mxu0 0
        %404 = vmatpush2.bf16.msra.mxu0 0
        %405 = vmatprep.subr.bf16.mxu0 0
        %406 = vmatpush2.bf16.msra.mxu0 0
        %407 = vmatprep.mubr.bf16.mxu0 0
        %408 = vmatmul.mubr.bf16.gmra.mxu0 %v352
        %v409 = vpop.f32.mrf.mxu0
        %v410 = vadd.f32 %v336, %v409
        %v411 = vpop.f32.mrf.mxu0
        %v412 = vpop.f32.mrf.mxu0
        %v413 = vadd.f32 %v336, %v412
        %v414 = vpop.f32.mrf.mxu0
        %415 = vmatprep.mubr.bf16.mxu0 0
        %416 = vmatmul.mubr.bf16.gmra.mxu0 %v355
        %v417 = vpop.f32.mrf.mxu0
        %v418 = vadd.f32 %v336, %v417
        %v419 = vpop.f32.mrf.mxu0
        %v420 = vpop.f32.mrf.mxu0
        %v421 = vadd.f32 %v336, %v420
        %v422 = vpop.f32.mrf.mxu0
        %423 = vmatprep.mubr.bf16.mxu0 0
        %424 = vmatmul.mubr.bf16.gmra.mxu0 %v358
        %v425 = vpop.f32.mrf.mxu0
        %v426 = vadd.f32 %v336, %v425
        %v427 = vpop.f32.mrf.mxu0
        %v428 = vpop.f32.mrf.mxu0
        %v429 = vadd.f32 %v336, %v428
        %v430 = vpop.f32.mrf.mxu0
        %431 = vmatprep.mubr.bf16.mxu0 0
        %432 = vmatmul.mubr.bf16.gmra.mxu0 %v361
        %v433 = vpop.f32.mrf.mxu0
        %v434 = vadd.f32 %v336, %v433
        %v435 = vpop.f32.mrf.mxu0
        %v436 = vpop.f32.mrf.mxu0
        %v437 = vadd.f32 %v336, %v436
        %v438 = vpop.f32.mrf.mxu0
        %439 = vmatprep.mubr.bf16.mxu0 0
        %440 = vmatmul.mubr.bf16.gmra.mxu0 %v364
        %v441 = vpop.f32.mrf.mxu0
        %v442 = vadd.f32 %v336, %v441
        %v443 = vpop.f32.mrf.mxu0
        %v444 = vpop.f32.mrf.mxu0
        %v445 = vadd.f32 %v336, %v444
        %v446 = vpop.f32.mrf.mxu0
        %447 = vmatprep.mubr.bf16.mxu0 0
        %448 = vmatmul.mubr.bf16.gmra.mxu0 %v367
        %v449 = vpop.f32.mrf.mxu0
        %v450 = vadd.f32 %v336, %v449
        %v451 = vpop.f32.mrf.mxu0
        %v452 = vpop.f32.mrf.mxu0
        %v453 = vadd.f32 %v336, %v452
        %v454 = vpop.f32.mrf.mxu0
        %455 = vmatprep.mubr.bf16.mxu0 0
        %456 = vmatmul.mubr.bf16.gmra.mxu0 %v370
        %v457 = vpop.f32.mrf.mxu0
        %v458 = vadd.f32 %v336, %v457
        %v459 = vpop.f32.mrf.mxu0
        %v460 = vpop.f32.mrf.mxu0
        %v461 = vadd.f32 %v336, %v460
        %v462 = vpop.f32.mrf.mxu0
        %463 = vmatprep.mubr.bf16.mxu0 0
        %464 = vmatmul.mubr.bf16.gmra.mxu0 %v373
        %v465 = vpop.f32.mrf.mxu0
        %v466 = vadd.f32 %v336, %v465
        %v467 = vpop.f32.mrf.mxu0
        %v468 = vpop.f32.mrf.mxu0
        %v469 = vadd.f32 %v336, %v468
        %v470 = vpop.f32.mrf.mxu0
        %471 = vdwg.mxu0
        %v472 = vmax.f32 %v410, 0.0
        %v473 = vmax.f32 %v413, 0.0
        %v474 = vmax.f32 %v418, 0.0
        %v475 = vmax.f32 %v421, 0.0
        %v476 = vmax.f32 %v426, 0.0
        %v477 = vmax.f32 %v429, 0.0
        %v478 = vmax.f32 %v434, 0.0
        %v479 = vmax.f32 %v437, 0.0
        %v480 = vmax.f32 %v442, 0.0
        %v481 = vmax.f32 %v445, 0.0
        %v482 = vmax.f32 %v450, 0.0
        %v483 = vmax.f32 %v453, 0.0
        %v484 = vmax.f32 %v458, 0.0
        %v485 = vmax.f32 %v461, 0.0
        %v486 = vmax.f32 %v466, 0.0
        %v487 = vmax.f32 %v469, 0.0
        %v488 = vpack.c.bf16 %v473, %v472
        %v489 = vpack.c.bf16 %v475, %v474
        %v490 = vpack.c.bf16 %v477, %v476
        %v491 = vpack.c.bf16 %v479, %v478
        %v492 = vpack.c.bf16 %v481, %v480
        %v493 = vpack.c.bf16 %v483, %v482
        %v494 = vpack.c.bf16 %v485, %v484
        %v495 = vpack.c.bf16 %v487, %v486
        %v496 = vld [vmem:[%s3] sm:$0xf]
        %v497 = vld [vmem:[%s3 + $0x4] sm:$0xf]
        %v498 = vld [vmem:[%s3 + $0x8] sm:$0xf]
        %v499 = vld [vmem:[%s3 + $0xc] sm:$0xf]
        %v500 = vld [vmem:[%s3 + $0x10] sm:$0xf]
        %v501 = vld [vmem:[%s3 + $0x14] sm:$0xf]
        %v502 = vld [vmem:[%s3 + $0x18] sm:$0xf]
        %v503 = vld [vmem:[%s3 + $0x1c] sm:$0xf]
        %v504 = vld [vmem:[%s3 + $0x20] sm:$0xf]
        %v505 = vld [vmem:[%s3 + $0x24] sm:$0xf]
        %v506 = vld [vmem:[%s3 + $0x28] sm:$0xf]
        %v507 = vld [vmem:[%s3 + $0x2c] sm:$0xf]
        %v508 = vld [vmem:[%s3 + $0x30] sm:$0xf]
        %v509 = vld [vmem:[%s3 + $0x34] sm:$0xf]
        %v510 = vld [vmem:[%s3 + $0x38] sm:$0xf]
        %v511 = vld [vmem:[%s3 + $0x3c] sm:$0xf]
        %v512 = vld [vmem:[%s4] sm:$0x1]
        %v514 = vlaneseq
        %v515 = vshrl.u32 %v514, 7
        %v516 = vsub.s32 0, %v515
        %v517 = vrot.slane %v512, %v516
        %v535 = vunpack.c.l.b16 %v496
        %v536 = vunpack.c.l.b16 %v497
        %v537 = vunpack.c.l.b16 %v498
        %v538 = vunpack.c.l.b16 %v499
        %v539 = vunpack.c.l.b16 %v500
        %v540 = vunpack.c.l.b16 %v501
        %v541 = vunpack.c.l.b16 %v502
        %v542 = vunpack.c.l.b16 %v503
        %v543 = vunpack.c.l.b16 %v504
        %v544 = vunpack.c.l.b16 %v505
        %v545 = vunpack.c.l.b16 %v506
        %v546 = vunpack.c.l.b16 %v507
        %v547 = vunpack.c.l.b16 %v508
        %v548 = vunpack.c.l.b16 %v509
        %v549 = vunpack.c.l.b16 %v510
        %v550 = vunpack.c.l.b16 %v511
        %v551 = vpack.c.b16 %v536, %v535
        %v552 = vpack.c.b16 %v538, %v537
        %v553 = vpack.c.b16 %v540, %v539
        %v554 = vpack.c.b16 %v542, %v541
        %v555 = vpack.c.b16 %v544, %v543
        %v556 = vpack.c.b16 %v546, %v545
        %v557 = vpack.c.b16 %v548, %v547
        %v558 = vpack.c.b16 %v550, %v549
        %567 = vmatprep.subr.bf16.mxu0 0
        %568 = vmatpush1.bf16.msra.mxu0 %v558
        %569 = vmatprep.subr.bf16.mxu0 0
        %570 = vmatpush1.bf16.msra.mxu0 %v557
        %571 = vmatprep.subr.bf16.mxu0 0
        %572 = vmatpush1.bf16.msra.mxu0 %v556
        %573 = vmatprep.subr.bf16.mxu0 0
        %574 = vmatpush1.bf16.msra.mxu0 %v555
        %575 = vmatprep.subr.bf16.mxu0 0
        %576 = vmatpush1.bf16.msra.mxu0 %v554
        %577 = vmatprep.subr.bf16.mxu0 0
        %578 = vmatpush1.bf16.msra.mxu0 %v553
        %579 = vmatprep.subr.bf16.mxu0 0
        %580 = vmatpush1.bf16.msra.mxu0 %v552
        %581 = vmatprep.subr.bf16.mxu0 0
        %582 = vmatpush1.bf16.msra.mxu0 %v551
        %583 = vmatprep.subr.bf16.mxu0 0
        %584 = vmatpush2.bf16.msra.mxu0 0
        %585 = vmatprep.subr.bf16.mxu0 0
        %586 = vmatpush2.bf16.msra.mxu0 0
        %587 = vmatprep.subr.bf16.mxu0 0
        %588 = vmatpush2.bf16.msra.mxu0 0
        %589 = vmatprep.subr.bf16.mxu0 0
        %590 = vmatpush2.bf16.msra.mxu0 0
        %591 = vmatprep.subr.bf16.mxu0 0
        %592 = vmatpush2.bf16.msra.mxu0 0
        %593 = vmatprep.subr.bf16.mxu0 0
        %594 = vmatpush2.bf16.msra.mxu0 0
        %595 = vmatprep.subr.bf16.mxu0 0
        %596 = vmatpush2.bf16.msra.mxu0 0
        %597 = vmatprep.subr.bf16.mxu0 0
        %598 = vmatpush2.bf16.msra.mxu0 0
        %599 = vmatprep.mubr.bf16.mxu0 0
        %600 = vmatmul.mubr.bf16.gmra.mxu0 %v488
        %v601 = vpop.f32.mrf.mxu0
        %v602 = vadd.f32 %v517, %v601
        %v603 = vpop.f32.mrf.mxu0
        %v604 = vpop.f32.mrf.mxu0
        %v605 = vadd.f32 %v517, %v604
        %v606 = vpop.f32.mrf.mxu0
        %607 = vmatprep.mubr.bf16.mxu0 0
        %608 = vmatmul.mubr.bf16.gmra.mxu0 %v489
        %v609 = vpop.f32.mrf.mxu0
        %v610 = vadd.f32 %v517, %v609
        %v611 = vpop.f32.mrf.mxu0
        %v612 = vpop.f32.mrf.mxu0
        %v613 = vadd.f32 %v517, %v612
        %v614 = vpop.f32.mrf.mxu0
        %615 = vmatprep.mubr.bf16.mxu0 0
        %616 = vmatmul.mubr.bf16.gmra.mxu0 %v490
        %v617 = vpop.f32.mrf.mxu0
        %v618 = vadd.f32 %v517, %v617
        %v619 = vpop.f32.mrf.mxu0
        %v620 = vpop.f32.mrf.mxu0
        %v621 = vadd.f32 %v517, %v620
        %v622 = vpop.f32.mrf.mxu0
        %623 = vmatprep.mubr.bf16.mxu0 0
        %624 = vmatmul.mubr.bf16.gmra.mxu0 %v491
        %v625 = vpop.f32.mrf.mxu0
        %v626 = vadd.f32 %v517, %v625
        %v627 = vpop.f32.mrf.mxu0
        %v628 = vpop.f32.mrf.mxu0
        %v629 = vadd.f32 %v517, %v628
        %v630 = vpop.f32.mrf.mxu0
        %631 = vmatprep.mubr.bf16.mxu0 0
        %632 = vmatmul.mubr.bf16.gmra.mxu0 %v492
        %v633 = vpop.f32.mrf.mxu0
        %v634 = vadd.f32 %v517, %v633
        %v635 = vpop.f32.mrf.mxu0
        %v636 = vpop.f32.mrf.mxu0
        %v637 = vadd.f32 %v517, %v636
        %v638 = vpop.f32.mrf.mxu0
        %639 = vmatprep.mubr.bf16.mxu0 0
        %640 = vmatmul.mubr.bf16.gmra.mxu0 %v493
        %v641 = vpop.f32.mrf.mxu0
        %v642 = vadd.f32 %v517, %v641
        %v643 = vpop.f32.mrf.mxu0
        %v644 = vpop.f32.mrf.mxu0
        %v645 = vadd.f32 %v517, %v644
        %v646 = vpop.f32.mrf.mxu0
        %647 = vmatprep.mubr.bf16.mxu0 0
        %648 = vmatmul.mubr.bf16.gmra.mxu0 %v494
        %v649 = vpop.f32.mrf.mxu0
        %v650 = vadd.f32 %v517, %v649
        %v651 = vpop.f32.mrf.mxu0
        %v652 = vpop.f32.mrf.mxu0
        %v653 = vadd.f32 %v517, %v652
        %v654 = vpop.f32.mrf.mxu0
        %655 = vmatprep.mubr.bf16.mxu0 0
        %656 = vmatmul.mubr.bf16.gmra.mxu0 %v495
        %v657 = vpop.f32.mrf.mxu0
        %v658 = vadd.f32 %v517, %v657
        %v659 = vpop.f32.mrf.mxu0
        %v660 = vpop.f32.mrf.mxu0
        %v661 = vadd.f32 %v517, %v660
        %v662 = vpop.f32.mrf.mxu0
        %663 = vdwg.mxu0
        %v664 = vmax.f32 %v602, 0.0
        %v665 = vmax.f32 %v605, 0.0
        %v666 = vmax.f32 %v610, 0.0
        %v667 = vmax.f32 %v613, 0.0
        %v668 = vmax.f32 %v618, 0.0
        %v669 = vmax.f32 %v621, 0.0
        %v670 = vmax.f32 %v626, 0.0
        %v671 = vmax.f32 %v629, 0.0
        %v672 = vmax.f32 %v634, 0.0
        %v673 = vmax.f32 %v637, 0.0
        %v674 = vmax.f32 %v642, 0.0
        %v675 = vmax.f32 %v645, 0.0
        %v676 = vmax.f32 %v650, 0.0
        %v677 = vmax.f32 %v653, 0.0
        %v678 = vmax.f32 %v658, 0.0
        %v679 = vmax.f32 %v661, 0.0
        %v680 = vld [vmem:[%s5] sm:$0x1]
        %v682 = vlaneseq
        %v683 = vshrl.u32 %v682, 7
        %v684 = vsub.s32 0, %v683
        %v685 = vrot.slane %v680, %v684
        %v687 = vmul.f32 %v664, %v685
        %v688 = vmul.f32 %v665, %v685
        %v689 = vmul.f32 %v666, %v685
        %v690 = vmul.f32 %v667, %v685
        %v691 = vmul.f32 %v668, %v685
        %v692 = vmul.f32 %v669, %v685
        %v693 = vmul.f32 %v670, %v685
        %v694 = vmul.f32 %v671, %v685
        %v695 = vmul.f32 %v672, %v685
        %v696 = vmul.f32 %v673, %v685
        %v697 = vmul.f32 %v674, %v685
        %v698 = vmul.f32 %v675, %v685
        %v699 = vmul.f32 %v676, %v685
        %v700 = vmul.f32 %v677, %v685
        %v701 = vmul.f32 %v678, %v685
        %v702 = vmul.f32 %v679, %v685
        %703 = vadd.xlane.f32.xlu0 %v687
        %v704 = vpop.xlane.xlu0 %703
        %705 = vadd.xlane.f32.xlu0 %v688
        %v706 = vpop.xlane.xlu0 %705
        %707 = vadd.xlane.f32.xlu0 %v689
        %v708 = vpop.xlane.xlu0 %707
        %709 = vadd.xlane.f32.xlu0 %v690
        %v710 = vpop.xlane.xlu0 %709
        %711 = vadd.xlane.f32.xlu0 %v691
        %v712 = vpop.xlane.xlu0 %711
        %713 = vadd.xlane.f32.xlu0 %v692
        %v714 = vpop.xlane.xlu0 %713
        %715 = vadd.xlane.f32.xlu0 %v693
        %v716 = vpop.xlane.xlu0 %715
        %717 = vadd.xlane.f32.xlu0 %v694
        %v718 = vpop.xlane.xlu0 %717
        %719 = vadd.xlane.f32.xlu0 %v695
        %v720 = vpop.xlane.xlu0 %719
        %721 = vadd.xlane.f32.xlu0 %v696
        %v722 = vpop.xlane.xlu0 %721
        %723 = vadd.xlane.f32.xlu0 %v697
        %v724 = vpop.xlane.xlu0 %723
        %725 = vadd.xlane.f32.xlu0 %v698
        %v726 = vpop.xlane.xlu0 %725
        %727 = vadd.xlane.f32.xlu0 %v699
        %v728 = vpop.xlane.xlu0 %727
        %729 = vadd.xlane.f32.xlu0 %v700
        %v730 = vpop.xlane.xlu0 %729
        %731 = vadd.xlane.f32.xlu0 %v701
        %v732 = vpop.xlane.xlu0 %731
        %733 = vadd.xlane.f32.xlu0 %v702
        %v734 = vpop.xlane.xlu0 %733
        %v735 = vld [vmem:[#allocation2] sm:$0x1]
        %v737 = vlaneseq
        %v738 = vshrl.u32 %v737, 7
        %v739 = vsub.s32 0, %v738
        %v740 = vrot.slane %v735, %v739
        %v742 = vadd.f32 %v704, %v740
        %v743 = vadd.f32 %v706, %v740
        %v744 = vadd.f32 %v708, %v740
        %v745 = vadd.f32 %v710, %v740
        %v746 = vadd.f32 %v712, %v740
        %v747 = vadd.f32 %v714, %v740
        %v748 = vadd.f32 %v716, %v740
        %v749 = vadd.f32 %v718, %v740
        %v750 = vadd.f32 %v720, %v740
        %v751 = vadd.f32 %v722, %v740
        %v752 = vadd.f32 %v724, %v740
        %v753 = vadd.f32 %v726, %v740
        %v754 = vadd.f32 %v728, %v740
        %v755 = vadd.f32 %v730, %v740
        %v756 = vadd.f32 %v732, %v740
        %v757 = vadd.f32 %v734, %v740
        %vm758 = vcmask 7168
        %759 = vst.msk [vmem:[%s282] sm:$0xff] %vm758, %v742
        %760 = vst.msk [vmem:[%s282 + $0x8] sm:$0xff] %vm758, %v743
        %761 = vst.msk [vmem:[%s282 + $0x10] sm:$0xff] %vm758, %v744
        %762 = vst.msk [vmem:[%s282 + $0x18] sm:$0xff] %vm758, %v745
        %763 = vst.msk [vmem:[%s282 + $0x20] sm:$0xff] %vm758, %v746
        %764 = vst.msk [vmem:[%s282 + $0x28] sm:$0xff] %vm758, %v747
        %765 = vst.msk [vmem:[%s282 + $0x30] sm:$0xff] %vm758, %v748
        %766 = vst.msk [vmem:[%s282 + $0x38] sm:$0xff] %vm758, %v749
        %767 = vst.msk [vmem:[%s282 + $0x40] sm:$0xff] %vm758, %v750
        %768 = vst.msk [vmem:[%s282 + $0x48] sm:$0xff] %vm758, %v751
        %769 = vst.msk [vmem:[%s282 + $0x50] sm:$0xff] %vm758, %v752
        %770 = vst.msk [vmem:[%s282 + $0x58] sm:$0xff] %vm758, %v753
        %771 = vst.msk [vmem:[%s282 + $0x60] sm:$0xff] %vm758, %v754
        %772 = vst.msk [vmem:[%s282 + $0x68] sm:$0xff] %vm758, %v755
        %773 = vst.msk [vmem:[%s282 + $0x70] sm:$0xff] %vm758, %v756
        %774 = vst.msk [vmem:[%s282 + $0x78] sm:$0xff] %vm758, %v757
        %s775 = sand.u32 %s180, 1
        %s776 = sand.u32 %s180, 1
        %s777 = smul.addr %s776, 128
        %s778 = scalar_lea.vmem [#allocation3], %s777
        // Predicated region
        $region49: #{fwd.1} parent=47 // pred_check
          %p779 = pneg %p190
        $region50: #{fwd.1} parent=47 // pred_check_branch
          %781 = sbr.rel (%p779) target = $region52
        $region51: #{fwd.1} parent=47 // pred_region
          %s782 = smul.u32 16, %s20
          %s783 = ssub.s32 25, %s782
          %p784 = scmp.lt.s32.totalorder %s783, 16
          %s785 = scalar_select %p784, %s783, 16
          %s786 = smul.u32 128, %s785
          %p787 = scmp.ne.s32.totalorder 0, %s786
          %s788 = smul.addr %s782, 8
          %s789 = scalar_lea.vmem %s7, %s788
          // Predicated region
          $region53: #{fwd.1} parent=51 // pred_check
            %p790 = pneg %p787
          $region54: #{fwd.1} parent=51 // pred_check_branch
            %792 = sbr.rel (%p790) target = $region56
          $region55: #{fwd.1} parent=51 // pred_region
            // Predicated region
            $region57: #{fwd.1} parent=55 // pred_check
              _
            $region58: #{fwd.1} parent=55 // pred_check_branch
              %794 = sbr.rel (0) target = $region60
            $region59: #{fwd.1} parent=55 // pred_region
              // Predicated region
              $region79: #{fwd.1} parent=59 // pred_check
                _
              $region80: #{fwd.1} parent=59 // pred_check_branch
                %874 = sbr.rel (0) target = $region82
              $region81: #{fwd.1} parent=59 // pred_region
                %s875 = sshrl.u32 %s785, 4
                // While loop
                $region83: #{fwd.1} parent=81 // loop_pre_header
                  _
                $region84: #{fwd.1} parent=81 // loop_header
                  %s877 = sphi 0, %s879
                  %p878 = scmp.ge.s32.totalorder %s877, %s875
                  %s882 = sphi 0, %s919
                  %s883 = sphi %s778, %s922
                  %s884 = sphi %s789, %s923
                $region85: #{fwd.1} parent=81 // loop_header_branch
                  %881 = sbr.rel (%p878) target = $region89
                $region86: #{fwd.1} parent=81 // loop_body
                  %v885 = vld [vmem:[%s883] sm:$0xff]
                  %886 = vst [vmem:[%s884] sm:$0xff] %v885
                  %v887 = vld [vmem:[%s883 + $0x8] sm:$0xff]
                  %888 = vst [vmem:[%s884 + $0x8] sm:$0xff] %v887
                  %v889 = vld [vmem:[%s883 + $0x10] sm:$0xff]
                  %890 = vst [vmem:[%s884 + $0x10] sm:$0xff] %v889
                  %v891 = vld [vmem:[%s883 + $0x18] sm:$0xff]
                  %892 = vst [vmem:[%s884 + $0x18] sm:$0xff] %v891
                  %v893 = vld [vmem:[%s883 + $0x20] sm:$0xff]
                  %894 = vst [vmem:[%s884 + $0x20] sm:$0xff] %v893
                  %v895 = vld [vmem:[%s883 + $0x28] sm:$0xff]
                  %896 = vst [vmem:[%s884 + $0x28] sm:$0xff] %v895
                  %v897 = vld [vmem:[%s883 + $0x30] sm:$0xff]
                  %898 = vst [vmem:[%s884 + $0x30] sm:$0xff] %v897
                  %v899 = vld [vmem:[%s883 + $0x38] sm:$0xff]
                  %900 = vst [vmem:[%s884 + $0x38] sm:$0xff] %v899
                  %v901 = vld [vmem:[%s883 + $0x40] sm:$0xff]
                  %902 = vst [vmem:[%s884 + $0x40] sm:$0xff] %v901
                  %v903 = vld [vmem:[%s883 + $0x48] sm:$0xff]
                  %904 = vst [vmem:[%s884 + $0x48] sm:$0xff] %v903
                  %v905 = vld [vmem:[%s883 + $0x50] sm:$0xff]
                  %906 = vst [vmem:[%s884 + $0x50] sm:$0xff] %v905
                  %v907 = vld [vmem:[%s883 + $0x58] sm:$0xff]
                  %908 = vst [vmem:[%s884 + $0x58] sm:$0xff] %v907
                  %v909 = vld [vmem:[%s883 + $0x60] sm:$0xff]
                  %910 = vst [vmem:[%s884 + $0x60] sm:$0xff] %v909
                  %v911 = vld [vmem:[%s883 + $0x68] sm:$0xff]
                  %912 = vst [vmem:[%s884 + $0x68] sm:$0xff] %v911
                  %v913 = vld [vmem:[%s883 + $0x70] sm:$0xff]
                  %914 = vst [vmem:[%s884 + $0x70] sm:$0xff] %v913
                  %v915 = vld [vmem:[%s883 + $0x78] sm:$0xff]
                  %916 = vst [vmem:[%s884 + $0x78] sm:$0xff] %v915
                  %s917 = sadd.s32 1, %s882
                  %p918 = scmp.ge.s32.totalorder %s917, %s875
                  %s919 = scalar_select %p918, 0, %s917
                  %s920 = smul.u32 %s919, 128
                  %s921 = smul.u32 %s919, 128
                  %s922 = scalar_lea.vmem %s778, %s920 [#allocation3]
                  %s923 = scalar_lea.vmem %s789, %s921
                $region87: #{fwd.1} parent=81 // loop_footer
                  %s879 = sadd.s32 %s877, 1
                $region88: #{fwd.1} parent=81 // loop_footer_branch
                  %876 = sbr.rel target = $region84
                $region89: #{fwd.1} parent=81 // loop_exit
                  _
                %s924 = sshrl.u32 %s785, 4
                %s925 = sand.u32 %s785, 15
                %s926 = smul.u32 %s924, 16
                %s927 = smul.u32 8, %s926
                %s928 = scalar_lea.vmem %s778, %s927 [#allocation3]
                %s929 = smul.u32 8, %s926
                %s930 = scalar_lea.vmem %s789, %s929
                // While loop
                $region90: #{fwd.1} parent=81 // loop_pre_header
                  _
                $region91: #{fwd.1} parent=81 // loop_header
                  %s932 = sphi 0, %s934
                  %p933 = scmp.ge.s32.totalorder %s932, %s925
                  %s937 = sphi 0, %s944
                  %s938 = sphi %s928, %s947
                  %s939 = sphi %s930, %s948
                $region92: #{fwd.1} parent=81 // loop_header_branch
                  %936 = sbr.rel (%p933) target = $region96
                $region93: #{fwd.1} parent=81 // loop_body
                  %v940 = vld [vmem:[%s938] sm:$0xff]
                  %941 = vst [vmem:[%s939] sm:$0xff] %v940
                  %s942 = sadd.s32 1, %s937
                  %p943 = scmp.ge.s32.totalorder %s942, %s925
                  %s944 = scalar_select %p943, 0, %s942
                  %s945 = smul.u32 %s944, 8
                  %s946 = smul.u32 %s944, 8
                  %s947 = scalar_lea.vmem %s928, %s945 [#allocation3]
                  %s948 = scalar_lea.vmem %s930, %s946
                $region94: #{fwd.1} parent=81 // loop_footer
                  %s934 = sadd.s32 %s932, 1
                $region95: #{fwd.1} parent=81 // loop_footer_branch
                  %931 = sbr.rel target = $region91
                $region96: #{fwd.1} parent=81 // loop_exit
                  _
              $region82: #{fwd.1} parent=59 // pred_fallthru
                _
              // Predicated region
              $region97: #{fwd.1} parent=59 // pred_check
                _
              $region98: #{fwd.1} parent=59 // pred_check_branch
                %950 = sbr.rel target = $region100
              $region99: #{fwd.1} parent=59 // pred_region
                _
              $region100: #{fwd.1} parent=59 // pred_fallthru
                _
            $region60: #{fwd.1} parent=55 // pred_fallthru
              _
            // Predicated region
            $region61: #{fwd.1} parent=55 // pred_check
              _
            $region62: #{fwd.1} parent=55 // pred_check_branch
              %796 = sbr.rel target = $region64
            $region63: #{fwd.1} parent=55 // pred_region
              %s798 = ssub.s32 256, 1
              %s799 = sshrl.u32 %s785, 4
              // While loop
              $region65: #{fwd.1} parent=63 // loop_pre_header
                _
              $region66: #{fwd.1} parent=63 // loop_header
                %s801 = sphi 0, %s803
                %p802 = scmp.ge.s32.totalorder %s801, %s799
                %s806 = sphi 0, %s843
                %s807 = sphi %s778, %s846
                %s808 = sphi %s789, %s847
              $region67: #{fwd.1} parent=63 // loop_header_branch
                %805 = sbr.rel (%p802) target = $region71
              $region68: #{fwd.1} parent=63 // loop_body
                %v809 = vld [vmem:[%s807] sm:%s798]
                %810 = vst [vmem:[%s808] sm:%s798] %v809
                %v811 = vld [vmem:[%s807 + $0x8] sm:%s798]
                %812 = vst [vmem:[%s808 + $0x8] sm:%s798] %v811
                %v813 = vld [vmem:[%s807 + $0x10] sm:%s798]
                %814 = vst [vmem:[%s808 + $0x10] sm:%s798] %v813
                %v815 = vld [vmem:[%s807 + $0x18] sm:%s798]
                %816 = vst [vmem:[%s808 + $0x18] sm:%s798] %v815
                %v817 = vld [vmem:[%s807 + $0x20] sm:%s798]
                %818 = vst [vmem:[%s808 + $0x20] sm:%s798] %v817
                %v819 = vld [vmem:[%s807 + $0x28] sm:%s798]
                %820 = vst [vmem:[%s808 + $0x28] sm:%s798] %v819
                %v821 = vld [vmem:[%s807 + $0x30] sm:%s798]
                %822 = vst [vmem:[%s808 + $0x30] sm:%s798] %v821
                %v823 = vld [vmem:[%s807 + $0x38] sm:%s798]
                %824 = vst [vmem:[%s808 + $0x38] sm:%s798] %v823
                %v825 = vld [vmem:[%s807 + $0x40] sm:%s798]
                %826 = vst [vmem:[%s808 + $0x40] sm:%s798] %v825
                %v827 = vld [vmem:[%s807 + $0x48] sm:%s798]
                %828 = vst [vmem:[%s808 + $0x48] sm:%s798] %v827
                %v829 = vld [vmem:[%s807 + $0x50] sm:%s798]
                %830 = vst [vmem:[%s808 + $0x50] sm:%s798] %v829
                %v831 = vld [vmem:[%s807 + $0x58] sm:%s798]
                %832 = vst [vmem:[%s808 + $0x58] sm:%s798] %v831
                %v833 = vld [vmem:[%s807 + $0x60] sm:%s798]
                %834 = vst [vmem:[%s808 + $0x60] sm:%s798] %v833
                %v835 = vld [vmem:[%s807 + $0x68] sm:%s798]
                %836 = vst [vmem:[%s808 + $0x68] sm:%s798] %v835
                %v837 = vld [vmem:[%s807 + $0x70] sm:%s798]
                %838 = vst [vmem:[%s808 + $0x70] sm:%s798] %v837
                %v839 = vld [vmem:[%s807 + $0x78] sm:%s798]
                %840 = vst [vmem:[%s808 + $0x78] sm:%s798] %v839
                %s841 = sadd.s32 1, %s806
                %p842 = scmp.ge.s32.totalorder %s841, %s799
                %s843 = scalar_select %p842, 0, %s841
                %s844 = smul.u32 %s843, 128
                %s845 = smul.u32 %s843, 128
                %s846 = scalar_lea.vmem %s778, %s844 [#allocation3]
                %s847 = scalar_lea.vmem %s789, %s845
              $region69: #{fwd.1} parent=63 // loop_footer
                %s803 = sadd.s32 %s801, 1
              $region70: #{fwd.1} parent=63 // loop_footer_branch
                %800 = sbr.rel target = $region66
              $region71: #{fwd.1} parent=63 // loop_exit
                _
              %s848 = sshrl.u32 %s785, 4
              %s849 = sand.u32 %s785, 15
              %s850 = smul.u32 %s848, 16
              %s851 = smul.u32 8, %s850
              %s852 = scalar_lea.vmem %s778, %s851 [#allocation3]
              %s853 = smul.u32 8, %s850
              %s854 = scalar_lea.vmem %s789, %s853
              // While loop
              $region72: #{fwd.1} parent=63 // loop_pre_header
                _
              $region73: #{fwd.1} parent=63 // loop_header
                %s856 = sphi 0, %s858
                %p857 = scmp.ge.s32.totalorder %s856, %s849
                %s861 = sphi 0, %s868
                %s862 = sphi %s852, %s871
                %s863 = sphi %s854, %s872
              $region74: #{fwd.1} parent=63 // loop_header_branch
                %860 = sbr.rel (%p857) target = $region78
              $region75: #{fwd.1} parent=63 // loop_body
                %v864 = vld [vmem:[%s862] sm:%s798]
                %865 = vst [vmem:[%s863] sm:%s798] %v864
                %s866 = sadd.s32 1, %s861
                %p867 = scmp.ge.s32.totalorder %s866, %s849
                %s868 = scalar_select %p867, 0, %s866
                %s869 = smul.u32 %s868, 8
                %s870 = smul.u32 %s868, 8
                %s871 = scalar_lea.vmem %s852, %s869 [#allocation3]
                %s872 = scalar_lea.vmem %s854, %s870
              $region76: #{fwd.1} parent=63 // loop_footer
                %s858 = sadd.s32 %s856, 1
              $region77: #{fwd.1} parent=63 // loop_footer_branch
                %855 = sbr.rel target = $region73
              $region78: #{fwd.1} parent=63 // loop_exit
                _
            $region64: #{fwd.1} parent=55 // pred_fallthru
              _
          $region56: #{fwd.1} parent=51 // pred_fallthru
            _
          %951 = vnop
        $region52: #{fwd.1} parent=47 // pred_fallthru
          _
      $region48: #{fwd.1} parent=5 // pred_fallthru
        _
      %p952 = scmp.le.s32.totalorder 2, %s15
      // Predicated region
      $region101: #{fwd.1} parent=5 // pred_check
        %p953 = pneg %p952
      $region102: #{fwd.1} parent=5 // pred_check_branch
        %955 = sbr.rel (%p953) target = $region104
      $region103: #{fwd.1} parent=5 // pred_region
        %s956 = ssub.s32 %s15, 2
        // Predicated region
        $region105: #{fwd.1} parent=103 // pred_check
          %p957 = pneg %p196
        $region106: #{fwd.1} parent=103 // pred_check_branch
          %959 = sbr.rel (%p957) target = $region108
        $region107: #{fwd.1} parent=103 // pred_region
          %s960 = sand.u32 %s181, 1
          %s961 = sand.u32 %s181, 1
          %s962 = smul.addr %s961, 128
          %s963 = scalar_lea.vmem [#allocation3], %s962
        $region108: #{fwd.1} parent=103 // pred_fallthru
          _
      $region104: #{fwd.1} parent=5 // pred_fallthru
        _
    $region6: #{fwd.1} parent=1 // loop_footer
      %s19 = sadd.s32 1, %s15
    $region7: #{fwd.1} parent=1 // loop_footer_branch
      %14 = sbr.rel target = $region3
    $region8: #{fwd.1} parent=1 // loop_exit
      _

</llo_original>
